<compile_context>
chip_gen: v6e
topology: v6e:2x2x1
jax: 0.10.0
libtpu: 0.0.40
codegen_flags: <defaults>
</compile_context>

<pallas_src>
import jax
import jax.numpy as jnp
from jax.experimental import pallas as pl
from jax.experimental.pallas import tpu as pltpu


def _add_kernel(x_ref, d_ref, o_ref):
    # Pure VPU elementwise add on the current VMEM tile.
    o_ref[...] = x_ref[...] + d_ref[...]


# Lane widths to try (capped at 2048 so full-width row blocks stay modest and
# the row axis carries the grid).
_LANE_PREFS = (2048, 1024, 512, 256, 128)
_TINY_BYTES = 2 << 20          # below this: single-block kernel, no grid
_BLOCK_BYTES_TARGET = 2 << 20  # ~2 MiB per block -> ~12 MiB pipelined footprint


def _choose_2d_layout(total: int):
    """Lane-dense (rows, cols, pad) factorization of the flat tensor.

    cols is always a multiple of 128; `pad` trailing elements are appended so
    rows * cols == total + pad (stores are never masked on the lane axis).
    """
    for lane in _LANE_PREFS:
        if total % lane == 0 and total // lane >= 8:
            return total // lane, lane, 0
    for lane in _LANE_PREFS:
        if total % lane == 0:
            return total // lane, lane, 0
    # Fallback: pad the flat length up to a multiple of 1024 (8 sublanes x 128
    # lanes); a tiny pad/slice is far cheaper than masked partial stores over
    # the whole tensor.
    padded = ((total + 1023) // 1024) * 1024
    return padded // 128, 128, padded - total


def rgbd_fuse(x: jax.Array, d: jax.Array) -> jax.Array:
    """Pallas implementation of RGBDFuse.forward: x + d (NCHW in, NCHW out).

    Note: jit with donate_argnums=0 (donating x) for input_output_aliases to
    actually drop the extra output buffer; without donation XLA inserts a
    defensive copy (correctness is unaffected either way).
    """
    assert x.shape == d.shape and x.dtype == d.dtype
    n, c, h, w = x.shape
    total = n * c * h * w
    itemsize = jnp.dtype(x.dtype).itemsize
    total_bytes = total * itemsize

    rows, cols, pad = _choose_2d_layout(total)

    def to_2d(a):
        flat = a.reshape(total)
        if pad:
            flat = jnp.pad(flat, (0, pad))
        return flat.reshape(rows, cols)

    x2 = to_2d(x)
    d2 = to_2d(d)

    cost = pl.CostEstimate(
        flops=total,
        transcendentals=0,
        bytes_accessed=3 * total_bytes,  # 2 reads + 1 write, purely HBM-bound
    )

    if total_bytes <= _TINY_BYTES:
        # Tiny-input fast path: one block = whole array, no grid, no per-step
        # pipeline overhead.
        out2 = pl.pallas_call(
            _add_kernel,
            out_shape=jax.ShapeDtypeStruct((rows, cols), x.dtype),
            input_output_aliases={0: 0},
            cost_estimate=cost,
        )(x2, d2)
    else:
        # Minimum sublane multiple so the second-to-last block dim stays
        # layout-aligned for packed dtypes (f32: 8, bf16: 16, int8/fp8: 32).
        min_sublane = max(8, 32 // itemsize)
        # Full-lane-width row blocks -> each grid step is one contiguous slab.
        target_rows = max(1, _BLOCK_BYTES_TARGET // (cols * itemsize))
        block_rows = min(rows, target_rows)
        if block_rows < rows:
            block_rows = max(min_sublane, (block_rows // min_sublane) * min_sublane)
            block_rows = min(block_rows, rows)
        grid = (pl.cdiv(rows, block_rows),)

        out2 = pl.pallas_call(
            _add_kernel,
            out_shape=jax.ShapeDtypeStruct((rows, cols), x.dtype),
            grid=grid,
            in_specs=[
                pl.BlockSpec((block_rows, cols), lambda i: (i, 0)),
                pl.BlockSpec((block_rows, cols), lambda i: (i, 0)),
            ],
            out_specs=pl.BlockSpec((block_rows, cols), lambda i: (i, 0)),
            compiler_params=pltpu.CompilerParams(
                # 1D row grid shards across both TensorCores on v7x; on
                # v5e/v6e (1 TC) parallel vs arbitrary is a measured no-op.
                dimension_semantics=("parallel",),
            ),
            input_output_aliases={0: 0},
            cost_estimate=cost,
        )(x2, d2)

    out_flat = out2.reshape(rows * cols)
    if pad:
        out_flat = out_flat[:total]
    return out_flat.reshape(n, c, h, w)


if __name__ == "__main__":
    key = jax.random.PRNGKey(0)
    kx, kd = jax.random.split(key)

    # Small NCHW shape consistent with the module (exercises the tiny path).
    N, C, H, W = 2, 4, 16, 16
    x = jax.random.normal(kx, (N, C, H, W), dtype=jnp.float32)
    d = jax.random.normal(kd, (N, C, H, W), dtype=jnp.float32)

    out = jax.block_until_ready(rgbd_fuse(x, d))
    ref = x + d
    assert out.shape == ref.shape and out.dtype == ref.dtype
    assert jnp.allclose(out, ref, atol=1e-6, rtol=1e-6)

    # Medium shape to exercise the tiled (gridded) path, incl. a remainder
    # block (rows=400, block_rows=256 -> grid=(2,)).
    N2, C2, H2, W2 = 2, 16, 160, 160
    kx2, kd2 = jax.random.split(jax.random.PRNGKey(1))
    x2 = jax.random.normal(kx2, (N2, C2, H2, W2), dtype=jnp.float32)
    d2 = jax.random.normal(kd2, (N2, C2, H2, W2), dtype=jnp.float32)

    out2 = jax.block_until_ready(rgbd_fuse(x2, d2))
    ref2 = x2 + d2
    assert out2.shape == ref2.shape and out2.dtype == ref2.dtype
    assert jnp.allclose(out2, ref2, atol=1e-6, rtol=1e-6)

    print("KERNEL_OK")
</pallas_src>

<mosaic_0001>
module attributes {stable_mosaic.version = 11 : i64} {
  func.func @_add_kernel(%arg0: memref<8x256xf32, #tpu.memory_space<vmem>>, %arg1: memref<8x256xf32, #tpu.memory_space<vmem>>, %arg2: memref<8x256xf32, #tpu.memory_space<vmem>>) attributes {dimension_semantics = [], scalar_prefetch = 0 : i64, scratch_operands = 0 : i64, tpu.core_type = #tpu.core_type<tc>} {
    %c0 = arith.constant 0 : index
    %c0_0 = arith.constant 0 : index
    %0 = vector.load %arg0[%c0, %c0_0] : memref<8x256xf32, #tpu.memory_space<vmem>>, vector<8x256xf32>
    %c0_1 = arith.constant 0 : index
    %c0_2 = arith.constant 0 : index
    %1 = vector.load %arg1[%c0_1, %c0_2] : memref<8x256xf32, #tpu.memory_space<vmem>>, vector<8x256xf32>
    %2 = arith.addf %0, %1 : vector<8x256xf32>
    %c0_3 = arith.constant 0 : index
    %c0_4 = arith.constant 0 : index
    %3 = vector.load %arg2[%c0_3, %c0_4] : memref<8x256xf32, #tpu.memory_space<vmem>>, vector<8x256xf32>
    tpu.vector_store %arg2[%c0_3, %c0_4], %2 {strides = array<i32>} : memref<8x256xf32, #tpu.memory_space<vmem>>, vector<8x256xf32>,
    return
  }
}

</mosaic_0001>

<llo_original>
// kernel: tpu_custom_call.1
$region0: #{tpu_custom_call.1}
  #allocation0 [shape = 'u32[]', space=smem, size = 0x4, offset = 0x4, fixed_abs, tag = 'smem constant byte address 0x4 - core index']
  #allocation1 [shape = 'u32[144,128]{1,0:T(1,128)}', space=vmem, size = 0x12000, scoped, tag = 'internal scratch']
  %s0 = inlined_call_operand.hbm [shape: f32[8,256], index: 0, kind: input, shape index: {}, may-alias: {0,2}]
  %s1 = inlined_call_operand.vmem [shape: f32[8,256], index: 1, kind: input, shape index: {}]
  %s2 = inlined_call_operand.hbm [shape: f32[8,256], index: 2, kind: output, shape index: {}, may-alias: {0,2}]
  %s3 = sld [smem:[#allocation0]]
  $region22: #{tpu_custom_call.1} parent=0
    _
  %s5 = ssub.s32 1, %s3
  %s6 = scalar_select 0, %s5, %s3
  $region1: #{tpu_custom_call.1} parent=0
    #allocation2 [shape = 'u8[8192]{0}', space=vmem, size = 0x2000, scoped, tag = 'input window, operand 0, single buffered']
    #allocation3 [shape = 's32[1]{0}', space=sflag, size = 0x4, scoped, tag = 'scoped memory for tpu_custom_call.1']
    #allocation4 [shape = 's32[1]{0}', space=sflag, size = 0x4, scoped, tag = 'scoped memory for tpu_custom_call.1']
    #allocation5 [shape = 'u8[8192]{0}', space=vmem, size = 0x2000, scoped, tag = 'output window, operand 0, single buffered']
    %7 = vsyncpa [#allocation3], 0
    %8 = vsyncpa [#allocation4], 0
    // Predicated region
    $region2: #{tpu_custom_call.1} parent=1 // pred_check
      _
    $region3: #{tpu_custom_call.1} parent=1 // pred_check_branch
      %10 = sbr.rel (0) target = $region5
    $region4: #{tpu_custom_call.1} parent=1 // pred_region
      %s12 = ssub.s32 256, 256
      %13 = vsyncadd [#allocation3], %s12
      %s15 = sshll.u32 [#allocation2], 4
      %s16 = int_to_ptr.vmem [resolvable:$true] %s15
      %18 = dma.hbm_to_vmem [thread:$0]  %s0, 256, %s16, [#allocation3]
    $region5: #{tpu_custom_call.1} parent=1 // pred_fallthru
      _
    // Predicated region
    $region6: #{tpu_custom_call.1} parent=1 // pred_check
      _
    $region7: #{tpu_custom_call.1} parent=1 // pred_check_branch
      %20 = sbr.rel (0) target = $region9
    $region8: #{tpu_custom_call.1} parent=1 // pred_region
      _
    $region9: #{tpu_custom_call.1} parent=1 // pred_fallthru
      _
    // Predicated region
    $region10: #{tpu_custom_call.1} parent=1 // pred_check
      _
    $region11: #{tpu_custom_call.1} parent=1 // pred_check_branch
      %22 = sbr.rel (0) target = $region13
    $region12: #{tpu_custom_call.1} parent=1 // pred_region
      %23 = dma.done [#allocation3], 256
    $region13: #{tpu_custom_call.1} parent=1 // pred_fallthru
      _
    %v24 = vld [vmem:[#allocation2] sm:$0xff]
    %v25 = vld [vmem:[#allocation2 + $0x8] sm:$0xff]
    %v26 = vld [vmem:[%s1] sm:$0xff]
    %v27 = vld [vmem:[%s1 + $0x8] sm:$0xff]
    %v28 = vadd.f32 %v24, %v26
    %v29 = vadd.f32 %v25, %v27
    %30 = vst [vmem:[#allocation5] sm:$0xff] %v28
    %31 = vst [vmem:[#allocation5 + $0x8] sm:$0xff] %v29
    // Predicated region
    $region14: #{tpu_custom_call.1} parent=1 // pred_check
      _
    $region15: #{tpu_custom_call.1} parent=1 // pred_check_branch
      %33 = sbr.rel (0) target = $region17
    $region16: #{tpu_custom_call.1} parent=1 // pred_region
      %s35 = ssub.s32 256, 256
      %36 = vsyncadd [#allocation4], %s35
      %s38 = sshll.u32 [#allocation5], 4
      %s39 = int_to_ptr.vmem [resolvable:$true] %s38
      %41 = dma.vmem_to_hbm [thread:$0]  %s39, 256, %s2, [#allocation4]
    $region17: #{tpu_custom_call.1} parent=1 // pred_fallthru
      _
    // Predicated region
    $region18: #{tpu_custom_call.1} parent=1 // pred_check
      _
    $region19: #{tpu_custom_call.1} parent=1 // pred_check_branch
      %43 = sbr.rel (0) target = $region21
    $region20: #{tpu_custom_call.1} parent=1 // pred_region
      %44 = dma.done [#allocation4], 256
    $region21: #{tpu_custom_call.1} parent=1 // pred_fallthru
      _
    %45 = vsyncpa [#allocation3], 1
    %46 = vsyncpa [#allocation4], 1

</llo_original>
